<compile_context>
chip_gen: v7x
topology: tpu7x:2x2x1
jax: 0.10.0
libtpu: 0.0.40
codegen_flags: <defaults>
</compile_context>

<pallas_src>
import math

import jax
import jax.numpy as jnp
from jax import lax
from jax.experimental import pallas as pl
from jax.experimental.pallas import tpu as pltpu


def _round_up(n, m):
    return (n + m - 1) // m * m


def _pick_tile_m(L, max_tile=1024):
    """Largest divisor of L that is a multiple of 8 and <= max_tile; else whole L."""
    best = None
    for tm in range(8, min(L, max_tile) + 1, 8):
        if L % tm == 0:
            best = tm
    return best if best is not None else L


def fold_token_conv_weight(conv_weight, compute_dtype=jnp.bfloat16):
    """Fold the PyTorch Conv1d weight [D, C, 3] into [3, C, Dp] (Dp = D padded to 128).

    Precompute this ONCE outside the hot path; tap k multiplies x[t - 1 + k] (mod L).
    """
    D, C, K = conv_weight.shape
    assert K == 3, "TokenEmbedding uses kernel_size=3"
    w = jnp.transpose(conv_weight, (2, 1, 0))            # (3, C, D)
    Dp = _round_up(D, 128)                               # lane-dense output tiles
    if Dp != D:
        w = jnp.pad(w, ((0, 0), (0, 0), (0, Dp - D)))
    return w.astype(compute_dtype)


def _token_embed_kernel(x_ref, halo_ref, w_ref, o_ref):
    # x_ref:    (1, tm, C)   f32 activation tile
    # halo_ref: (1, 1, 2, C) f32 circular halo rows [x[(t0-1) % L], x[(t0+tm) % L]]
    # w_ref:    (3, C, Dp)   bf16 folded conv taps
    # o_ref:    (1, tm, Dp)
    x = x_ref[0]                                          # (tm, C)
    tm, C = x.shape
    halo = halo_ref[...]
    h_prev = halo[0, 0, 0:1, :]                           # (1, C)
    h_next = halo[0, 0, 1:2, :]                           # (1, C)

    # Build the 3-tap circular receptive field entirely in VMEM (no HBM expansion).
    if tm % 8 == 0:
        # XLU sublane rotation (separate issue slot from the VPU/MXU work), then
        # patch the single wrapped row with the cross-tile halo row.
        row = lax.broadcasted_iota(jnp.int32, (tm, C), 0)
        x_prev = jnp.where(row == 0, h_prev, pltpu.roll(x, shift=1, axis=0))
        x_next = jnp.where(row == tm - 1, h_next, pltpu.roll(x, shift=tm - 1, axis=0))
    else:
        # Fallback for odd tile heights (only hit when L has no multiple-of-8 divisor).
        x_prev = jnp.concatenate([h_prev, x[:-1, :]], axis=0)
        x_next = jnp.concatenate([x[1:, :], h_next], axis=0)

    bf16 = jnp.bfloat16
    acc = jnp.dot(x_prev.astype(bf16), w_ref[0], preferred_element_type=jnp.float32)
    acc = acc + jnp.dot(x.astype(bf16), w_ref[1], preferred_element_type=jnp.float32)
    acc = acc + jnp.dot(x_next.astype(bf16), w_ref[2], preferred_element_type=jnp.float32)
    o_ref[0] = acc.astype(o_ref.dtype)


def token_embedding(x, w_folded, d_model):
    """x: [B, L, C] float32; w_folded: [3, C, Dp] from fold_token_conv_weight.

    Returns [B, L, d_model] in x.dtype (circular Conv1d, k=3, no bias).
    """
    B, L, C = x.shape
    K, Cw, Dp = w_folded.shape
    assert K == 3 and Cw == C and Dp >= d_model and Dp % 128 == 0

    tm = _pick_tile_m(L)
    num_m = L // tm

    # Two halo rows per (batch, tile): circular predecessor of the tile's first row
    # and circular successor of its last row (tiny gather, negligible HBM bytes).
    prev_rows = jnp.asarray([(m * tm - 1) % L for m in range(num_m)], dtype=jnp.int32)
    next_rows = jnp.asarray([((m + 1) * tm) % L for m in range(num_m)], dtype=jnp.int32)
    halo = jnp.stack(
        [jnp.take(x, prev_rows, axis=1), jnp.take(x, next_rows, axis=1)], axis=2
    )                                                     # (B, num_m, 2, C)

    out = pl.pallas_call(
        _token_embed_kernel,
        out_shape=jax.ShapeDtypeStruct((B, L, Dp), x.dtype),
        grid_spec=pltpu.PrefetchScalarGridSpec(
            num_scalar_prefetch=0,
            grid=(B, num_m),
            in_specs=[
                pl.BlockSpec((1, tm, C), lambda b, m: (b, m, 0)),
                pl.BlockSpec((1, 1, 2, C), lambda b, m: (b, m, 0, 0)),
                pl.BlockSpec((3, C, Dp), lambda b, m: (0, 0, 0)),
            ],
            out_specs=pl.BlockSpec((1, tm, Dp), lambda b, m: (b, m, 0)),
        ),
        compiler_params=pltpu.CompilerParams(
            dimension_semantics=("parallel", "parallel"),
            vmem_limit_bytes=48 * 1024 * 1024,
        ),
    )(x, halo, w_folded)

    if Dp != d_model:
        out = out[..., :d_model]
    return out


if __name__ == "__main__":
    B, L, C_in, D = 2, 16, 4, 32
    key = jax.random.PRNGKey(0)
    kx, kw = jax.random.split(key)
    x = jax.random.normal(kx, (B, L, C_in), dtype=jnp.float32)

    # kaiming_normal_(mode='fan_in', nonlinearity='leaky_relu'), default slope 0.01
    fan_in = C_in * 3
    gain = math.sqrt(2.0 / (1.0 + 0.01 ** 2))
    std = gain / math.sqrt(fan_in)
    conv_w = std * jax.random.normal(kw, (D, C_in, 3), dtype=jnp.float32)

    w_folded = fold_token_conv_weight(conv_w)             # hoisted out of the hot path
    fwd = jax.jit(token_embedding, static_argnums=(2,))
    y = fwd(x, w_folded, D)
    jax.block_until_ready(y)

    # Reference: circular pad + 3-tap conv with the same bf16 rounding of x and w
    # (f32 accumulation), so the check isolates layout / halo / roll correctness.
    xb = x.astype(jnp.bfloat16).astype(jnp.float32)
    wb = w_folded.astype(jnp.float32)[:, :, :D]           # (3, C, D)
    x_pad = jnp.concatenate([xb[:, -1:, :], xb, xb[:, :1, :]], axis=1)
    ref = jnp.zeros((B, L, D), jnp.float32)
    for k in range(3):
        ref = ref + jnp.einsum("blc,cd->bld", x_pad[:, k:k + L, :], wb[k])

    assert y.shape == (B, L, D) and y.dtype == x.dtype
    assert jnp.allclose(y, ref, atol=1e-3, rtol=1e-3), float(jnp.max(jnp.abs(y - ref)))
    print("KERNEL_OK")
</pallas_src>

<mosaic_0001>
module attributes {stable_mosaic.version = 11 : i64} {
  func.func @_token_embed_kernel(%arg0: i32, %arg1: i32, %arg2: memref<1x16x4xf32, #tpu.memory_space<vmem>>, %arg3: memref<1x1x2x4xf32, #tpu.memory_space<vmem>>, %arg4: memref<3x4x128xbf16, #tpu.memory_space<vmem>>, %arg5: memref<1x16x128xf32, #tpu.memory_space<vmem>>) attributes {dimension_semantics = [#tpu.dimension_semantics<parallel>, #tpu.dimension_semantics<parallel>], iteration_bounds = array<i64: 2, 1>, scalar_prefetch = 0 : i64, scratch_operands = 0 : i64, tpu.core_type = #tpu.core_type<tc>, window_params = [{transform_indices = @transform_0, window_bounds = array<i64: 1, 16, 4>}, {transform_indices = @transform_1, window_bounds = array<i64: 1, 1, 2, 4>}, {pipeline_mode = #tpu.pipeline_mode<synchronous>, transform_indices = @transform_2, window_bounds = array<i64: 3, 4, 128>}, {transform_indices = @transform_3, window_bounds = array<i64: 1, 16, 128>}]} {
    %c0 = arith.constant 0 : index
    %c0_0 = arith.constant 0 : index
    %c0_1 = arith.constant 0 : index
    %0 = vector.load %arg2[%c0, %c0_0, %c0_1] : memref<1x16x4xf32, #tpu.memory_space<vmem>>, vector<1x16x4xf32>
    %1 = vector.shape_cast %0 : vector<1x16x4xf32> to vector<16x4xf32>
    %c0_2 = arith.constant 0 : index
    %c0_3 = arith.constant 0 : index
    %c0_4 = arith.constant 0 : index
    %c0_5 = arith.constant 0 : index
    %2 = vector.load %arg3[%c0_2, %c0_3, %c0_4, %c0_5] : memref<1x1x2x4xf32, #tpu.memory_space<vmem>>, vector<1x1x2x4xf32>
    %3 = vector.extract_strided_slice %2 {offsets = [0, 0, 0, 0], sizes = [1, 1, 1, 4], strides = [1, 1, 1, 1]} : vector<1x1x2x4xf32> to vector<1x1x1x4xf32>
    %4 = vector.shape_cast %3 : vector<1x1x1x4xf32> to vector<1x4xf32>
    %5 = vector.extract_strided_slice %2 {offsets = [0, 0, 1, 0], sizes = [1, 1, 1, 4], strides = [1, 1, 1, 1]} : vector<1x1x2x4xf32> to vector<1x1x1x4xf32>
    %6 = vector.shape_cast %5 : vector<1x1x1x4xf32> to vector<1x4xf32>
    %7 = tpu.iota {dimensions = array<i32: 0>} : vector<16x4xi32>
    %c0_i32 = arith.constant 0 : i32
    %8 = vector.broadcast %c0_i32 : i32 to vector<16x4xi32>
    %9 = arith.cmpi eq, %7, %8 : vector<16x4xi32>
    %c1_i32 = arith.constant 1 : i32
    %10 = tpu.dynamic_rotate %1 by %c1_i32 dim 0 : vector<16x4xf32>, i32 -> vector<16x4xf32>
    %11 = vector.shape_cast %4 : vector<1x4xf32> to vector<1x4xf32>
    %12 = vector.broadcast %11 : vector<1x4xf32> to vector<16x4xf32>
    %13 = arith.select %9, %12, %10 : vector<16x4xi1>, vector<16x4xf32>
    %c15_i32 = arith.constant 15 : i32
    %14 = vector.broadcast %c15_i32 : i32 to vector<16x4xi32>
    %15 = arith.cmpi eq, %7, %14 : vector<16x4xi32>
    %c15_i32_6 = arith.constant 15 : i32
    %16 = tpu.dynamic_rotate %1 by %c15_i32_6 dim 0 : vector<16x4xf32>, i32 -> vector<16x4xf32>
    %17 = vector.shape_cast %6 : vector<1x4xf32> to vector<1x4xf32>
    %18 = vector.broadcast %17 : vector<1x4xf32> to vector<16x4xf32>
    %19 = arith.select %15, %18, %16 : vector<16x4xi1>, vector<16x4xf32>
    %20 = arith.truncf %13 : vector<16x4xf32> to vector<16x4xbf16>
    %c0_7 = arith.constant 0 : index
    %c0_8 = arith.constant 0 : index
    %c0_9 = arith.constant 0 : index
    %21 = vector.load %arg4[%c0_7, %c0_8, %c0_9] : memref<3x4x128xbf16, #tpu.memory_space<vmem>>, vector<1x4x128xbf16>
    %22 = vector.shape_cast %21 : vector<1x4x128xbf16> to vector<4x128xbf16>
    %cst = arith.constant dense<0.000000e+00> : vector<16x128xf32>
    %23 = tpu.matmul %20, %22, %cst {dimension_numbers = #tpu.dot_dimension_numbers<[1], [0], [0], [1], [0, 0, 1, 1], [], []>} : vector<16x4xbf16>, vector<4x128xbf16>, vector<16x128xf32> -> vector<16x128xf32>
    %24 = arith.truncf %1 : vector<16x4xf32> to vector<16x4xbf16>
    %c1 = arith.constant 1 : index
    %c0_10 = arith.constant 0 : index
    %c0_11 = arith.constant 0 : index
    %25 = vector.load %arg4[%c1, %c0_10, %c0_11] : memref<3x4x128xbf16, #tpu.memory_space<vmem>>, vector<1x4x128xbf16>
    %26 = vector.shape_cast %25 : vector<1x4x128xbf16> to vector<4x128xbf16>
    %cst_12 = arith.constant dense<0.000000e+00> : vector<16x128xf32>
    %27 = tpu.matmul %24, %26, %cst_12 {dimension_numbers = #tpu.dot_dimension_numbers<[1], [0], [0], [1], [0, 0, 1, 1], [], []>} : vector<16x4xbf16>, vector<4x128xbf16>, vector<16x128xf32> -> vector<16x128xf32>
    %28 = arith.addf %23, %27 : vector<16x128xf32>
    %29 = arith.truncf %19 : vector<16x4xf32> to vector<16x4xbf16>
    %c2 = arith.constant 2 : index
    %c0_13 = arith.constant 0 : index
    %c0_14 = arith.constant 0 : index
    %30 = vector.load %arg4[%c2, %c0_13, %c0_14] : memref<3x4x128xbf16, #tpu.memory_space<vmem>>, vector<1x4x128xbf16>
    %31 = vector.shape_cast %30 : vector<1x4x128xbf16> to vector<4x128xbf16>
    %cst_15 = arith.constant dense<0.000000e+00> : vector<16x128xf32>
    %32 = tpu.matmul %29, %31, %cst_15 {dimension_numbers = #tpu.dot_dimension_numbers<[1], [0], [0], [1], [0, 0, 1, 1], [], []>} : vector<16x4xbf16>, vector<4x128xbf16>, vector<16x128xf32> -> vector<16x128xf32>
    %33 = arith.addf %28, %32 : vector<16x128xf32>
    %c0_16 = arith.constant 0 : index
    %c0_17 = arith.constant 0 : index
    %c0_18 = arith.constant 0 : index
    %34 = vector.load %arg5[%c0_16, %c0_17, %c0_18] : memref<1x16x128xf32, #tpu.memory_space<vmem>>, vector<1x16x128xf32>
    %35 = vector.shape_cast %34 : vector<1x16x128xf32> to vector<16x128xf32>
    %36 = vector.shape_cast %33 : vector<16x128xf32> to vector<1x16x128xf32>
    tpu.vector_store %arg5[%c0_16, %c0_17, %c0_18], %36 {strides = array<i32>} : memref<1x16x128xf32, #tpu.memory_space<vmem>>, vector<1x16x128xf32>,
    return
  }
  func.func @transform_0(%arg0: i32, %arg1: i32) -> (i32, i32, i32) {
    %c0_i32 = arith.constant 0 : i32
    %c0_i32_0 = arith.constant 0 : i32
    return %arg0, %arg1, %c0_i32 : i32, i32, i32
  }
  func.func @transform_1(%arg0: i32, %arg1: i32) -> (i32, i32, i32, i32) {
    %c0_i32 = arith.constant 0 : i32
    %c0_i32_0 = arith.constant 0 : i32
    %c0_i32_1 = arith.constant 0 : i32
    return %arg0, %arg1, %c0_i32, %c0_i32_0 : i32, i32, i32, i32
  }
  func.func @transform_2(%arg0: i32, %arg1: i32) -> (i32, i32, i32) {
    %c0_i32 = arith.constant 0 : i32
    %c0_i32_0 = arith.constant 0 : i32
    %c0_i32_1 = arith.constant 0 : i32
    %c0_i32_2 = arith.constant 0 : i32
    return %c0_i32, %c0_i32_0, %c0_i32_1 : i32, i32, i32
  }
  func.func @transform_3(%arg0: i32, %arg1: i32) -> (i32, i32, i32) {
    %c0_i32 = arith.constant 0 : i32
    %c0_i32_0 = arith.constant 0 : i32
    return %arg0, %arg1, %c0_i32 : i32, i32, i32
  }
}

</mosaic_0001>

<llo_original>
// kernel: token_embedding.1
$region0: #{token_embedding.1}
  #allocation0 [shape = 'u32[]', space=smem, size = 0x4, offset = 0x4, fixed_abs, tag = 'smem constant byte address 0x4 - core index']
  #allocation1 [shape = 'u32[144,128]{1,0:T(1,128)}', space=vmem, size = 0x12000, scoped, tag = 'internal scratch']
  %s0 = inlined_call_operand.vmem [shape: f32[2,16,4], index: 0, kind: input, shape index: {}]
  %s1 = inlined_call_operand.vmem [shape: f32[2,1,2,4], index: 1, kind: input, shape index: {}]
  %s2 = inlined_call_operand.vmem [shape: bf16[3,4,128], index: 2, kind: input, shape index: {}]
  %s3 = inlined_call_operand.hbm [shape: f32[2,16,128], index: 3, kind: output, shape index: {}]
  %s4 = sld [smem:[#allocation0]]
  $region45: #{token_embedding.1} parent=0
    _
  %s6 = ssub.s32 1, %s4
  %s7 = scalar_select 0, %s6, %s4
  $region1: #{token_embedding.1} parent=0
    #allocation2 [shape = 'u8[16384]{0}', space=vmem, size = 0x4000, scoped, tag = 'output window, operand 0']
    #allocation3 [shape = 's32[2]{0}', space=sflag, size = 0x8, scoped, tag = 'scoped memory for token_embedding.1']
    %8 = vsyncpa [#allocation3], 0
    %s9 = scalar_lea.sflag [#allocation3], 1
    %10 = vsyncpa %s9, 0
    loop: start=0, step=1, limit=4
    $region2: #{token_embedding.1} parent=1 // loop_pre_header
      _
    $region3: #{token_embedding.1} parent=1 // loop_header
      %s12 = sphi 0, %s16
      %p13 = scmp.ge.s32.totalorder %s12, 4
      %s19 = sphi 0, %s31
      %s20 = sphi 0, %s27
      %s21 = sphi 0, %s19
      %s22 = sphi 0, %s20
      %s23 = sphi 0, %s21
      %s24 = sphi 0, %s22
      %s36 = sphi 0, %s38
      %s39 = sphi 0, %s36
      %s40 = sphi 0, %s39
      %s56 = sphi 0, %s40
      %s64 = sphi 0, %s66
      %s67 = sphi 0, %s64
      %s68 = sphi 0, %s67
      %s84 = sphi 0, %s68
      %s88 = sphi 0, %s88
      %s90 = sphi 0, %s88
      %s91 = sphi 0, %s90
      %s105 = sphi 0, %s91
      %s113 = sphi 0, %s115
      %s116 = sphi 0, %s113
      %s117 = sphi 0, %s116
      %s133 = sphi 0, %s117
    $region4: #{token_embedding.1} parent=1 // loop_header_branch
      %15 = sbr.rel (%p13) target = $region8
    $region5: #{token_embedding.1} parent=1 // loop_body
      %s17 = ssub.s32 %s12, 1
      %s18 = ssub.s32 %s12, 2
      %s25 = sadd.s32 1, %s20
      %p26 = scmp.ge.s32.totalorder %s25, 1
      %s27 = scalar_select %p26, 0, %s25
      %s28 = sadd.s32 1, %s19
      %s29 = scalar_select %p26, %s28, %s19
      %p30 = scmp.ge.s32.totalorder %s29, 2
      %s31 = scalar_select %p30, 0, %s29
      %s32 = ssub.s32 %s19, %s31
      %s33 = ssub.s32 %s20, %s27
      %s34 = sor.u32 %s32, %s33
      %p35 = scmp.eq.s32.totalorder %s34, 0
      %s37 = sadd.s32 %s36, 1
      %s38 = scalar_select %p35, %s36, %s37
      %p41 = pneg %p35
      %p42 = scmp.eq.s32.totalorder %s12, 1
      %p43 = por %p41, %p42
      %p44 = scmp.ne.s32.totalorder %s36, %s39
      %p45 = scmp.eq.s32.totalorder %s12, 0
      %p46 = por %p44, %p45
      %p47 = scmp.ne.s32.totalorder %s36, %s39
      %p48 = scmp.eq.s32.totalorder %s17, 1
      %p49 = por %p47, %p48
      %p50 = scmp.ne.s32.totalorder %s39, %s40
      %p51 = scmp.eq.s32.totalorder %s17, 0
      %p52 = por %p50, %p51
      %p53 = scmp.ne.s32.totalorder %s39, %s40
      %p54 = scmp.eq.s32.totalorder %s18, 1
      %p55 = por %p53, %p54
      %p57 = scmp.ne.s32.totalorder %s40, %s56
      %p58 = scmp.eq.s32.totalorder %s18, 0
      %p59 = por %p57, %p58
      %s60 = ssub.s32 %s19, %s31
      %s61 = ssub.s32 %s20, %s27
      %s62 = sor.u32 %s60, %s61
      %p63 = scmp.eq.s32.totalorder %s62, 0
      %s65 = sadd.s32 %s64, 1
      %s66 = scalar_select %p63, %s64, %s65
      %p69 = pneg %p63
      %p70 = scmp.eq.s32.totalorder %s12, 1
      %p71 = por %p69, %p70
      %p72 = scmp.ne.s32.totalorder %s64, %s67
      %p73 = scmp.eq.s32.totalorder %s12, 0
      %p74 = por %p72, %p73
      %p75 = scmp.ne.s32.totalorder %s64, %s67
      %p76 = scmp.eq.s32.totalorder %s17, 1
      %p77 = por %p75, %p76
      %p78 = scmp.ne.s32.totalorder %s67, %s68
      %p79 = scmp.eq.s32.totalorder %s17, 0
      %p80 = por %p78, %p79
      %p81 = scmp.ne.s32.totalorder %s67, %s68
      %p82 = scmp.eq.s32.totalorder %s18, 1
      %p83 = por %p81, %p82
      %p85 = scmp.ne.s32.totalorder %s68, %s84
      %p86 = scmp.eq.s32.totalorder %s18, 0
      %p87 = por %p85, %p86
      %s89 = sadd.s32 %s88, 1
      %p92 = scmp.eq.s32.totalorder %s12, 1
      %p93 = scmp.ne.s32.totalorder %s88, %s90
      %p94 = scmp.eq.s32.totalorder %s12, 0
      %p95 = por %p93, %p94
      %p96 = scmp.ne.s32.totalorder %s88, %s90
      %p97 = scmp.eq.s32.totalorder %s17, 1
      %p98 = por %p96, %p97
      %p99 = scmp.ne.s32.totalorder %s90, %s91
      %p100 = scmp.eq.s32.totalorder %s17, 0
      %p101 = por %p99, %p100
      %p102 = scmp.ne.s32.totalorder %s90, %s91
      %p103 = scmp.eq.s32.totalorder %s18, 1
      %p104 = por %p102, %p103
      %p106 = scmp.ne.s32.totalorder %s91, %s105
      %p107 = scmp.eq.s32.totalorder %s18, 0
      %p108 = por %p106, %p107
      %s109 = ssub.s32 %s19, %s31
      %s110 = ssub.s32 %s20, %s27
      %s111 = sor.u32 %s109, %s110
      %p112 = scmp.eq.s32.totalorder %s111, 0
      %s114 = sadd.s32 %s113, 1
      %s115 = scalar_select %p112, %s113, %s114
      %p118 = pneg %p112
      %p119 = scmp.eq.s32.totalorder %s12, 1
      %p120 = por %p118, %p119
      %p121 = scmp.ne.s32.totalorder %s113, %s116
      %p122 = scmp.eq.s32.totalorder %s12, 0
      %p123 = por %p121, %p122
      %p124 = scmp.ne.s32.totalorder %s113, %s116
      %p125 = scmp.eq.s32.totalorder %s17, 1
      %p126 = por %p124, %p125
      %p127 = scmp.ne.s32.totalorder %s116, %s117
      %p128 = scmp.eq.s32.totalorder %s17, 0
      %p129 = por %p127, %p128
      %p130 = scmp.ne.s32.totalorder %s116, %s117
      %p131 = scmp.eq.s32.totalorder %s18, 1
      %p132 = por %p130, %p131
      %p134 = scmp.ne.s32.totalorder %s117, %s133
      %p135 = scmp.eq.s32.totalorder %s18, 0
      %p136 = por %p134, %p135
      %p137 = scmp.le.s32.totalorder 1, %s12
      %p138 = scmp.lt.s32.totalorder %s12, 3
      %p139 = pnand %p137, %p138
      %p140 = pneg %p139
      // Predicated region
      $region9: #{token_embedding.1} parent=5 // pred_check
        _
      $region10: #{token_embedding.1} parent=5 // pred_check_branch
        %142 = sbr.rel (%p139) target = $region12
      $region11: #{token_embedding.1} parent=5 // pred_region
        %s143 = ssub.s32 %s12, 1
        // Predicated region
        $region13: #{token_embedding.1} parent=11 // pred_check
          %p144 = pneg %p101
        $region14: #{token_embedding.1} parent=11 // pred_check_branch
          %146 = sbr.rel (%p144) target = $region16
        $region15: #{token_embedding.1} parent=11 // pred_region
          _
        $region16: #{token_embedding.1} parent=11 // pred_fallthru
          _
      $region12: #{token_embedding.1} parent=5 // pred_fallthru
        _
      %p147 = scmp.lt.s32.totalorder %s12, 2
      // Predicated region
      $region17: #{token_embedding.1} parent=5 // pred_check
        %p148 = pneg %p147
      $region18: #{token_embedding.1} parent=5 // pred_check_branch
        %150 = sbr.rel (%p148) target = $region20
      $region19: #{token_embedding.1} parent=5 // pred_region
        // Predicated region
        $region21: #{token_embedding.1} parent=19 // pred_check
          %p151 = pneg %p46
        $region22: #{token_embedding.1} parent=19 // pred_check_branch
          %153 = sbr.rel (%p151) target = $region24
        $region23: #{token_embedding.1} parent=19 // pred_region
          %s154 = smul.u32 2, %s20
          %p155 = scmp.lt.s32.totalorder %s19, 1
          %s156 = scalar_select %p155, %s19, 1
          %p157 = scmp.lt.s32.totalorder %s154, 1
          %s158 = scalar_select %p157, %s154, 1
          %s159 = smul.addr %s156, 2
          %s160 = sadd.s32 %s158, %s159
          %s161 = smul.addr %s160, 8
          %s162 = scalar_lea.vmem %s0, %s161
          %s163 = smul.u32 2, %s20
        $region24: #{token_embedding.1} parent=19 // pred_fallthru
          _
        // Predicated region
        $region25: #{token_embedding.1} parent=19 // pred_check
          %p164 = pneg %p74
        $region26: #{token_embedding.1} parent=19 // pred_check_branch
          %166 = sbr.rel (%p164) target = $region28
        $region27: #{token_embedding.1} parent=19 // pred_region
          %p167 = scmp.lt.s32.totalorder %s19, 1
          %s168 = scalar_select %p167, %s19, 1
          %p169 = scmp.lt.s32.totalorder %s20, 0
          %s170 = scalar_select %p169, %s20, 0
          %s171 = sadd.s32 %s170, %s168
          %s172 = smul.addr %s171, 2
          %s173 = scalar_lea.vmem %s1, %s172
        $region28: #{token_embedding.1} parent=19 // pred_fallthru
          _
      $region20: #{token_embedding.1} parent=5 // pred_fallthru
        _
      %p174 = scmp.le.s32.totalorder 1, %s12
      %p175 = scmp.lt.s32.totalorder %s12, 3
      %p176 = pnand %p174, %p175
      %p177 = pneg %p176
      // Predicated region
      $region29: #{token_embedding.1} parent=5 // pred_check
        _
      $region30: #{token_embedding.1} parent=5 // pred_check_branch
        %179 = sbr.rel (%p176) target = $region32
      $region31: #{token_embedding.1} parent=5 // pred_region
        %s180 = ssub.s32 %s12, 1
        %s181 = smul.u32 2, %s22
        %p182 = scmp.lt.s32.totalorder %s21, 1
        %s183 = scalar_select %p182, %s21, 1
        %p184 = scmp.lt.s32.totalorder %s181, 1
        %s185 = scalar_select %p184, %s181, 1
        %s186 = smul.addr %s183, 2
        %s187 = sadd.s32 %s185, %s186
        %s188 = smul.addr %s187, 8
        %s189 = scalar_lea.vmem %s0, %s188
        %p190 = pneg %p52
        %p191 = pneg %p49
        %p192 = scmp.lt.s32.totalorder %s21, 1
        %s193 = scalar_select %p192, %s21, 1
        %p194 = scmp.lt.s32.totalorder %s22, 0
        %s195 = scalar_select %p194, %s22, 0
        %s196 = sadd.s32 %s195, %s193
        %s197 = smul.addr %s196, 2
        %s198 = scalar_lea.vmem %s1, %s197
        %p199 = pneg %p80
        %p200 = pneg %p77
        %p201 = pneg %p101
        %p202 = pneg %p98
        %p203 = pneg %p129
        %p204 = pneg %p126
        %s205 = sand.u32 %s116, 1
        %s206 = scalar_lea.sflag [#allocation3], %s205
        %s207 = sand.u32 %s116, 1
        %s208 = smul.addr %s207, 16
        %s209 = scalar_lea.vmem [#allocation2], %s208
        %s210 = smul.u32 2, %s22
        %p211 = scmp.lt.s32.totalorder %s21, 1
        %s212 = scalar_select %p211, %s21, 1
        %p213 = scmp.lt.s32.totalorder %s210, 1
        %s214 = scalar_select %p213, %s210, 1
        %s215 = smul.addr %s212, 2
        %s216 = sadd.s32 %s214, %s215
        %s217 = smul.addr %s216, 8
        %s218 = scalar_lea.vmem %s0, %s217
        %s219 = smul.u32 2, %s22
        %p220 = scmp.lt.s32.totalorder %s21, 1
        %s221 = scalar_select %p220, %s21, 1
        %p222 = scmp.lt.s32.totalorder %s22, 0
        %s223 = scalar_select %p222, %s22, 0
        %s224 = sadd.s32 %s223, %s221
        %s225 = smul.addr %s224, 2
        %s226 = scalar_lea.vmem %s1, %s225
        %s227 = smul.u32 2, %s22
        %v229 = vld [vmem:[%s218] sm:$0xff]
        %v230 = vld [vmem:[%s218 + $0x8] sm:$0xff]
        %v231 = vld [vmem:[%s226] sm:$0x3]
        %v232 = vlaneseq
        %v233 = vshrl.u32 %v232, 7
        %v234 = vadd.s32 %v233, 8
        %vm235 = vcmp.eq.s32.totalorder %v233, 0
        %vm236 = vcmp.eq.s32.totalorder %v234, 0
        %v237 = vrot.slane %v229, 7
        %v238 = vrot.slane %v230, 7
        %vm239 = vcmp.lt.s32.totalorder %v233, 1
        %v240 = vsel %vm239, %v237, %v238
        %v241 = vsel %vm239, %v238, %v237
        %v242 = vlaneseq
        %v243 = vshrl.u32 %v242, 7
        %v244 = vsub.s32 0, %v243
        %v245 = vrot.slane %v231, %v244
        %v246 = vsel %vm235, %v245, %v241
        %v247 = vsel %vm236, %v245, %v240
        %vm248 = vcmp.eq.s32.totalorder %v233, 15
        %vm249 = vcmp.eq.s32.totalorder %v234, 15
        %v250 = vrot.slane %v229, 1
        %v251 = vrot.slane %v230, 1
        %vm252 = vcmp.lt.s32.totalorder %v233, 7
        %v253 = vsel %vm252, %v250, %v251
        %v254 = vsel %vm252, %v251, %v250
        %v255 = vlaneseq
        %v256 = vshrl.u32 %v255, 7
        %v257 = vsub.s32 1, %v256
        %v258 = vrot.slane %v231, %v257
        %v259 = vsel %vm248, %v258, %v253
        %v260 = vsel %vm249, %v258, %v254
        %v261 = vpack.c.bf16 %v247, %v246
        %v262 = vld [vmem:[%s2] sm:$0x3]
        %v263 = vpack.c.bf16 %v230, %v229
        %s264 = scalar_lea.vmem %s2, 2
        %v265 = vld [vmem:[%s264] sm:$0x3]
        %vm266 = vcmask 31744
        %v268 = vsel %vm266, %v263, 0
        %vm270 = vcmask 1041408
        %v272 = vsel %vm270, %v265, 0
        %274 = vmatprep.subr.bf16.mxu0 0
        %275 = vmatpush1.bf16.msra.mxu0 %v272
        %276 = vmatprep.subr.bf16.mxu0 0
        %277 = vmatpush1.bf16.msra.mxu0 0
        %278 = vmatprep.subr.bf16.mxu0 0
        %279 = vmatpush1.bf16.msra.mxu0 0
        %280 = vmatprep.subr.bf16.mxu0 0
        %281 = vmatpush1.bf16.msra.mxu0 0
        %282 = vmatprep.subr.bf16.mxu0 0
        %283 = vmatpush1.bf16.msra.mxu0 0
        %284 = vmatprep.subr.bf16.mxu0 0
        %285 = vmatpush1.bf16.msra.mxu0 0
        %286 = vmatprep.subr.bf16.mxu0 0
        %287 = vmatpush1.bf16.msra.mxu0 0
        %288 = vmatprep.subr.bf16.mxu0 0
        %289 = vmatpush1.bf16.msra.mxu0 0
        %290 = vmatprep.subr.bf16.mxu0 0
        %291 = vmatpush1.bf16.msra.mxu0 0
        %292 = vmatprep.subr.bf16.mxu0 0
        %293 = vmatpush1.bf16.msra.mxu0 0
        %294 = vmatprep.subr.bf16.mxu0 0
        %295 = vmatpush1.bf16.msra.mxu0 0
        %296 = vmatprep.subr.bf16.mxu0 0
        %297 = vmatpush1.bf16.msra.mxu0 0
        %298 = vmatprep.subr.bf16.mxu0 0
        %299 = vmatpush1.bf16.msra.mxu0 0
        %300 = vmatprep.subr.bf16.mxu0 0
        %301 = vmatpush1.bf16.msra.mxu0 0
        %302 = vmatprep.subr.bf16.mxu0 0
        %303 = vmatpush1.bf16.msra.mxu0 0
        %304 = vmatprep.subr.bf16.mxu0 0
        %305 = vmatpush1.bf16.msra.mxu0 0
        %306 = vmatprep.mubr.bf16.mxu0 0
        %307 = vmatmul.mubr.bf16.gmra.mrb[0].mxu0 %v268
        %v308 = vpop.f32.mrb[0].mxu0
        %v309 = vadd.f32 0.0, %v308
        %v310 = vpop.f32.mrb[0].mxu0
        %v311 = vpop.f32.mrb[0].mxu0
        %v312 = vadd.f32 0.0, %v311
        %v313 = vpop.f32.mrb[0].mxu0
        %314 = vdwg.mxu0
        %v316 = vsel %vm266, %v261, 0
        %v319 = vsel %vm270, %v262, 0
        %321 = vmatprep.subr.bf16.mxu0 0
        %322 = vmatpush1.bf16.msra.mxu0 %v319
        %323 = vmatprep.subr.bf16.mxu0 0
        %324 = vmatpush1.bf16.msra.mxu0 0
        %325 = vmatprep.subr.bf16.mxu0 0
        %326 = vmatpush1.bf16.msra.mxu0 0
        %327 = vmatprep.subr.bf16.mxu0 0
        %328 = vmatpush1.bf16.msra.mxu0 0
        %329 = vmatprep.subr.bf16.mxu0 0
        %330 = vmatpush1.bf16.msra.mxu0 0
        %331 = vmatprep.subr.bf16.mxu0 0
        %332 = vmatpush1.bf16.msra.mxu0 0
        %333 = vmatprep.subr.bf16.mxu0 0
        %334 = vmatpush1.bf16.msra.mxu0 0
        %335 = vmatprep.subr.bf16.mxu0 0
        %336 = vmatpush1.bf16.msra.mxu0 0
        %337 = vmatprep.subr.bf16.mxu0 0
        %338 = vmatpush1.bf16.msra.mxu0 0
        %339 = vmatprep.subr.bf16.mxu0 0
        %340 = vmatpush1.bf16.msra.mxu0 0
        %341 = vmatprep.subr.bf16.mxu0 0
        %342 = vmatpush1.bf16.msra.mxu0 0
        %343 = vmatprep.subr.bf16.mxu0 0
        %344 = vmatpush1.bf16.msra.mxu0 0
        %345 = vmatprep.subr.bf16.mxu0 0
        %346 = vmatpush1.bf16.msra.mxu0 0
        %347 = vmatprep.subr.bf16.mxu0 0
        %348 = vmatpush1.bf16.msra.mxu0 0
        %349 = vmatprep.subr.bf16.mxu0 0
        %350 = vmatpush1.bf16.msra.mxu0 0
        %351 = vmatprep.subr.bf16.mxu0 0
        %352 = vmatpush1.bf16.msra.mxu0 0
        %353 = vmatprep.mubr.bf16.mxu0 0
        %354 = vmatmul.mubr.bf16.gmra.mrb[0].mxu0 %v316
        %v355 = vpop.f32.mrb[0].mxu0
        %v356 = vadd.f32 %v309, %v355
        %v357 = vpop.f32.mrb[0].mxu0
        %v358 = vpop.f32.mrb[0].mxu0
        %v359 = vadd.f32 %v312, %v358
        %v360 = vpop.f32.mrb[0].mxu0
        %361 = vdwg.mxu0
        %v362 = vpack.c.bf16 %v260, %v259
        %s363 = scalar_lea.vmem %s2, 4
        %v364 = vld [vmem:[%s363] sm:$0x3]
        %v366 = vsel %vm266, %v362, 0
        %v369 = vsel %vm270, %v364, 0
        %371 = vmatprep.subr.bf16.mxu0 0
        %372 = vmatpush1.bf16.msra.mxu0 %v369
        %373 = vmatprep.subr.bf16.mxu0 0
        %374 = vmatpush1.bf16.msra.mxu0 0
        %375 = vmatprep.subr.bf16.mxu0 0
        %376 = vmatpush1.bf16.msra.mxu0 0
        %377 = vmatprep.subr.bf16.mxu0 0
        %378 = vmatpush1.bf16.msra.mxu0 0
        %379 = vmatprep.subr.bf16.mxu0 0
        %380 = vmatpush1.bf16.msra.mxu0 0
        %381 = vmatprep.subr.bf16.mxu0 0
        %382 = vmatpush1.bf16.msra.mxu0 0
        %383 = vmatprep.subr.bf16.mxu0 0
        %384 = vmatpush1.bf16.msra.mxu0 0
        %385 = vmatprep.subr.bf16.mxu0 0
        %386 = vmatpush1.bf16.msra.mxu0 0
        %387 = vmatprep.subr.bf16.mxu0 0
        %388 = vmatpush1.bf16.msra.mxu0 0
        %389 = vmatprep.subr.bf16.mxu0 0
        %390 = vmatpush1.bf16.msra.mxu0 0
        %391 = vmatprep.subr.bf16.mxu0 0
        %392 = vmatpush1.bf16.msra.mxu0 0
        %393 = vmatprep.subr.bf16.mxu0 0
        %394 = vmatpush1.bf16.msra.mxu0 0
        %395 = vmatprep.subr.bf16.mxu0 0
        %396 = vmatpush1.bf16.msra.mxu0 0
        %397 = vmatprep.subr.bf16.mxu0 0
        %398 = vmatpush1.bf16.msra.mxu0 0
        %399 = vmatprep.subr.bf16.mxu0 0
        %400 = vmatpush1.bf16.msra.mxu0 0
        %401 = vmatprep.subr.bf16.mxu0 0
        %402 = vmatpush1.bf16.msra.mxu0 0
        %403 = vmatprep.mubr.bf16.mxu0 0
        %404 = vmatmul.mubr.bf16.gmra.mrb[0].mxu0 %v366
        %v405 = vpop.f32.mrb[0].mxu0
        %v406 = vadd.f32 0.0, %v405
        %v407 = vpop.f32.mrb[0].mxu0
        %v408 = vpop.f32.mrb[0].mxu0
        %v409 = vadd.f32 0.0, %v408
        %v410 = vpop.f32.mrb[0].mxu0
        %411 = vdwg.mxu0
        %v412 = vadd.f32 %v356, %v406
        %v413 = vadd.f32 %v359, %v409
        %414 = vst [vmem:[%s209] sm:$0xff] %v412
        %415 = vst [vmem:[%s209 + $0x8] sm:$0xff] %v413
        %s416 = sand.u32 %s116, 1
        %s417 = scalar_lea.sflag [#allocation3], %s416
        %s418 = sand.u32 %s116, 1
        %s419 = smul.addr %s418, 16
        %s420 = scalar_lea.vmem [#allocation2], %s419
        // Predicated region
        $region33: #{token_embedding.1} parent=31 // pred_check
          %p421 = pneg %p126
        $region34: #{token_embedding.1} parent=31 // pred_check_branch
          %423 = sbr.rel (%p421) target = $region36
        $region35: #{token_embedding.1} parent=31 // pred_region
          %s424 = smul.u32 2, %s22
          %s426 = ssub.s32 256, 256
          %427 = vsyncadd %s417, %s426
          %s428 = smul.addr %s21, 2
          %s429 = sadd.s32 %s424, %s428
          %s430 = smul.addr %s429, 128
          %s431 = scalar_lea.hbm %s3, %s430
          %s432 = sshll.u32 %s420, 4
          %s433 = int_to_ptr.vmem [resolvable:$true] %s432
          %438 = dma.vmem_to_hbm [thread:$0]  %s433, 256, %s431, %s417, 128, 128, 8
        $region36: #{token_embedding.1} parent=31 // pred_fallthru
          _
      $region32: #{token_embedding.1} parent=5 // pred_fallthru
        _
      %p439 = scmp.le.s32.totalorder 2, %s12
      // Predicated region
      $region37: #{token_embedding.1} parent=5 // pred_check
        %p440 = pneg %p439
      $region38: #{token_embedding.1} parent=5 // pred_check_branch
        %442 = sbr.rel (%p440) target = $region40
      $region39: #{token_embedding.1} parent=5 // pred_region
        %s443 = ssub.s32 %s12, 2
        // Predicated region
        $region41: #{token_embedding.1} parent=39 // pred_check
          %p444 = pneg %p132
        $region42: #{token_embedding.1} parent=39 // pred_check_branch
          %446 = sbr.rel (%p444) target = $region44
        $region43: #{token_embedding.1} parent=39 // pred_region
          %s447 = sand.u32 %s117, 1
          %s448 = scalar_lea.sflag [#allocation3], %s447
          %s449 = sand.u32 %s117, 1
          %s450 = smul.addr %s449, 16
          %s451 = scalar_lea.vmem [#allocation2], %s450
          %452 = dma.done %s448, 256
        $region44: #{token_embedding.1} parent=39 // pred_fallthru
          _
      $region40: #{token_embedding.1} parent=5 // pred_fallthru
        _
    $region6: #{token_embedding.1} parent=1 // loop_footer
      %s16 = sadd.s32 1, %s12
    $region7: #{token_embedding.1} parent=1 // loop_footer_branch
      %11 = sbr.rel target = $region3
    $region8: #{token_embedding.1} parent=1 // loop_exit
      _
    %453 = vsyncpa [#allocation3], 1
    %s454 = scalar_lea.sflag [#allocation3], 1
    %455 = vsyncpa %s454, 1

</llo_original>
